<compile_context>
chip_gen: v7x
topology: tpu7x:2x2x1
jax: 0.10.0
libtpu: 0.0.40
codegen_flags: <defaults>
</compile_context>

<pallas_src>
import jax
import jax.numpy as jnp
from jax.experimental import pallas as pl
from jax.experimental.pallas import tpu as pltpu


def qnet_kernel(x_ref, w1_ref, b1_ref, w2_ref, b2_ref, w3_ref, b3_ref, o_ref):
    """Transposed-layout MLP tile: x (4, TB) -> o (2, TB)."""
    x = x_ref[...].astype(jnp.float32)           # (4, TB)  lane-dense
    w1 = w1_ref[...].astype(jnp.float32)         # (64, 4)

    # fc1 + ReLU on the VPU: the contraction dim is only 4, so an MXU pass
    # would be ~97% zero padding.  Four broadcast multiply-adds on (64, TB).
    h1 = b1_ref[...]                             # (64, 1) broadcasts over lanes
    for k in range(x_ref.shape[0]):
        h1 = h1 + w1[:, k:k + 1] * x[k:k + 1, :]
    h1 = jnp.maximum(h1, 0.0)                    # (64, TB) f32

    # fc2 + ReLU: (64,64) @ (64,TB) on the MXU, f32 accumulation.
    h2 = jnp.dot(w2_ref[...], h1.astype(w2_ref.dtype),
                 preferred_element_type=jnp.float32) + b2_ref[...]
    h2 = jnp.maximum(h2, 0.0)                    # (64, TB) f32

    # fc3: (2,64) @ (64,TB) — output lane dim is TB, so stores are unmasked.
    out = jnp.dot(w3_ref[...], h2.astype(w3_ref.dtype),
                  preferred_element_type=jnp.float32) + b3_ref[...]
    o_ref[...] = out.astype(o_ref.dtype)


def qnet_forward(x, params, *, batch_tile=1024, compute_dtype=jnp.bfloat16):
    """Forward pass.  x: (B, 4) float32 -> (B, 2) float32.

    compute_dtype is the MXU operand dtype for fc2/fc3 (bf16 by default;
    accumulation and all bias/ReLU math stay f32).
    """
    if batch_tile % 128 != 0:
        raise ValueError("batch_tile must be a multiple of 128 (lane width)")
    B = x.shape[0]

    w1 = params["w1"].astype(jnp.float32)                  # (64, 4)  VPU path
    b1 = params["b1"].astype(jnp.float32).reshape(-1, 1)   # (64, 1)
    w2 = params["w2"].astype(compute_dtype)                # (64, 64) MXU
    b2 = params["b2"].astype(jnp.float32).reshape(-1, 1)   # (64, 1)
    w3 = params["w3"].astype(compute_dtype)                # (2, 64)  MXU
    b3 = params["b3"].astype(jnp.float32).reshape(-1, 1)   # (2, 1)
    n_in, n_out = w1.shape[1], w3.shape[0]

    xt = x.astype(jnp.float32).T                           # (4, B): batch on lanes
    weights = (w1, b1, w2, b2, w3, b3)

    if B <= batch_tile:
        # Small batch: single block, no grid (grid machinery is pure overhead).
        full = lambda a: pl.BlockSpec(a.shape, lambda: (0,) * a.ndim,
                                      memory_space=pltpu.VMEM)
        out_t = pl.pallas_call(
            qnet_kernel,
            out_shape=jax.ShapeDtypeStruct((n_out, B), jnp.float32),
            in_specs=[full(xt)] + [full(w) for w in weights],
            out_specs=pl.BlockSpec((n_out, B), lambda: (0, 0),
                                   memory_space=pltpu.VMEM),
            compiler_params=pltpu.CompilerParams(
                vmem_limit_bytes=32 * 1024 * 1024),
        )(xt, *weights)
        return out_t.T

    # Large batch: tile the lane (batch) axis; pad B up to a tile multiple and
    # slice the padding off in the wrapper.
    n_tiles = pl.cdiv(B, batch_tile)
    b_pad = n_tiles * batch_tile
    if b_pad != B:
        xt = jnp.pad(xt, ((0, 0), (0, b_pad - B)))

    const = lambda a: pl.BlockSpec(a.shape, lambda i: (0,) * a.ndim,
                                   memory_space=pltpu.VMEM)
    out_t = pl.pallas_call(
        qnet_kernel,
        out_shape=jax.ShapeDtypeStruct((n_out, b_pad), jnp.float32),
        grid=(n_tiles,),
        in_specs=[pl.BlockSpec((n_in, batch_tile), lambda i: (0, i),
                               memory_space=pltpu.VMEM)]
                 + [const(w) for w in weights],
        out_specs=pl.BlockSpec((n_out, batch_tile), lambda i: (0, i),
                               memory_space=pltpu.VMEM),
        compiler_params=pltpu.CompilerParams(
            dimension_semantics=("parallel",),
            vmem_limit_bytes=32 * 1024 * 1024),
    )(xt, *weights)
    return out_t[:, :B].T


def init_params(key):
    """nn.Linear-style init: weight (out, in), bias (out,), U(-1/sqrt(in), 1/sqrt(in))."""
    keys = jax.random.split(key, 6)

    def linear(kw, kb, fan_in, fan_out):
        bound = 1.0 / float(jnp.sqrt(float(fan_in)))
        w = jax.random.uniform(kw, (fan_out, fan_in), jnp.float32, -bound, bound)
        b = jax.random.uniform(kb, (fan_out,), jnp.float32, -bound, bound)
        return w, b

    w1, b1 = linear(keys[0], keys[1], 4, 64)
    w2, b2 = linear(keys[2], keys[3], 64, 64)
    w3, b3 = linear(keys[4], keys[5], 64, 2)
    return {"w1": w1, "b1": b1, "w2": w2, "b2": b2, "w3": w3, "b3": b3}


def qnet_reference(x, p):
    """Pure-JAX reference.  fc1 is done elementwise in exact f32 (matching the
    kernel's VPU path for K=4); fc2/fc3 as plain dots."""
    h1 = jnp.maximum((x[:, None, :] * p["w1"][None, :, :]).sum(-1) + p["b1"], 0.0)
    h2 = jnp.maximum(h1 @ p["w2"].T + p["b2"], 0.0)
    return h2 @ p["w3"].T + p["b3"]


def sample_action(obs, params, epsilon, key):
    """Epsilon-greedy action (JAX analogue of Qnet.sample_action); the random
    coin / random action live in plain JAX around the kernel, not inside it."""
    q = qnet_forward(obs.reshape(1, -1), params, compute_dtype=jnp.float32)[0]
    k_coin, k_act = jax.random.split(key)
    coin = jax.random.uniform(k_coin)
    random_action = jax.random.randint(k_act, (), 0, q.shape[0])
    return jnp.where(coin < epsilon, random_action, jnp.argmax(q))


if __name__ == "__main__":
    key = jax.random.PRNGKey(0)
    k_small, k_big, k_params = jax.random.split(key, 3)
    params = init_params(k_params)

    # 1) Tiny CartPole-style batch (B=8): single-block path, full f32 compute.
    x_small = jax.random.normal(k_small, (8, 4), jnp.float32)
    out_small = jax.block_until_ready(
        qnet_forward(x_small, params, compute_dtype=jnp.float32))
    ref_small = qnet_reference(x_small, params)
    assert out_small.shape == (8, 2), out_small.shape
    # 1e-3 tolerance: allows for MXU multi-pass f32 rounding vs the XLA dots.
    assert jnp.allclose(out_small, ref_small, atol=1e-3, rtol=1e-3), (
        float(jnp.max(jnp.abs(out_small - ref_small))))

    # 2) Batched inference (B=300, deliberately not a tile multiple): gridded
    #    lane-tiled path with bf16 MXU operands / f32 accumulation.
    x_big = jax.random.normal(k_big, (300, 4), jnp.float32)
    out_big = jax.block_until_ready(
        qnet_forward(x_big, params, batch_tile=128,
                     compute_dtype=jnp.bfloat16))
    ref_big = qnet_reference(x_big, params)
    assert out_big.shape == (300, 2), out_big.shape
    # bf16 operands -> ~1e-2-level agreement with the pure-f32 reference.
    assert jnp.allclose(out_big, ref_big, atol=5e-2, rtol=5e-2), (
        float(jnp.max(jnp.abs(out_big - ref_big))))

    print("KERNEL_OK")
</pallas_src>

<mosaic_0001>
module attributes {stable_mosaic.version = 11 : i64} {
  func.func @qnet_kernel(%arg0: memref<4x8xf32, #tpu.memory_space<vmem>>, %arg1: memref<64x4xf32, #tpu.memory_space<vmem>>, %arg2: memref<64x1xf32, #tpu.memory_space<vmem>>, %arg3: memref<64x64xf32, #tpu.memory_space<vmem>>, %arg4: memref<64x1xf32, #tpu.memory_space<vmem>>, %arg5: memref<2x64xf32, #tpu.memory_space<vmem>>, %arg6: memref<2x1xf32, #tpu.memory_space<vmem>>, %arg7: memref<2x8xf32, #tpu.memory_space<vmem>>) attributes {dimension_semantics = [], scalar_prefetch = 0 : i64, scratch_operands = 0 : i64, tpu.core_type = #tpu.core_type<tc>} {
    %c0 = arith.constant 0 : index
    %c0_0 = arith.constant 0 : index
    %0 = vector.load %arg0[%c0, %c0_0] : memref<4x8xf32, #tpu.memory_space<vmem>>, vector<4x8xf32>
    %c0_1 = arith.constant 0 : index
    %c0_2 = arith.constant 0 : index
    %1 = vector.load %arg1[%c0_1, %c0_2] : memref<64x4xf32, #tpu.memory_space<vmem>>, vector<64x4xf32>
    %c0_3 = arith.constant 0 : index
    %c0_4 = arith.constant 0 : index
    %2 = vector.load %arg2[%c0_3, %c0_4] : memref<64x1xf32, #tpu.memory_space<vmem>>, vector<64x1xf32>
    %3 = vector.extract_strided_slice %1 {offsets = [0, 0], sizes = [64, 1], strides = [1, 1]} : vector<64x4xf32> to vector<64x1xf32>
    %4 = vector.extract_strided_slice %0 {offsets = [0, 0], sizes = [1, 8], strides = [1, 1]} : vector<4x8xf32> to vector<1x8xf32>
    %5 = vector.broadcast %3 : vector<64x1xf32> to vector<64x8xf32>
    %6 = vector.broadcast %4 : vector<1x8xf32> to vector<64x8xf32>
    %7 = arith.mulf %5, %6 : vector<64x8xf32>
    %8 = vector.broadcast %2 : vector<64x1xf32> to vector<64x8xf32>
    %9 = arith.addf %8, %7 : vector<64x8xf32>
    %10 = vector.extract_strided_slice %1 {offsets = [0, 1], sizes = [64, 1], strides = [1, 1]} : vector<64x4xf32> to vector<64x1xf32>
    %11 = vector.extract_strided_slice %0 {offsets = [1, 0], sizes = [1, 8], strides = [1, 1]} : vector<4x8xf32> to vector<1x8xf32>
    %12 = vector.broadcast %10 : vector<64x1xf32> to vector<64x8xf32>
    %13 = vector.broadcast %11 : vector<1x8xf32> to vector<64x8xf32>
    %14 = arith.mulf %12, %13 : vector<64x8xf32>
    %15 = arith.addf %9, %14 : vector<64x8xf32>
    %16 = vector.extract_strided_slice %1 {offsets = [0, 2], sizes = [64, 1], strides = [1, 1]} : vector<64x4xf32> to vector<64x1xf32>
    %17 = vector.extract_strided_slice %0 {offsets = [2, 0], sizes = [1, 8], strides = [1, 1]} : vector<4x8xf32> to vector<1x8xf32>
    %18 = vector.broadcast %16 : vector<64x1xf32> to vector<64x8xf32>
    %19 = vector.broadcast %17 : vector<1x8xf32> to vector<64x8xf32>
    %20 = arith.mulf %18, %19 : vector<64x8xf32>
    %21 = arith.addf %15, %20 : vector<64x8xf32>
    %22 = vector.extract_strided_slice %1 {offsets = [0, 3], sizes = [64, 1], strides = [1, 1]} : vector<64x4xf32> to vector<64x1xf32>
    %23 = vector.extract_strided_slice %0 {offsets = [3, 0], sizes = [1, 8], strides = [1, 1]} : vector<4x8xf32> to vector<1x8xf32>
    %24 = vector.broadcast %22 : vector<64x1xf32> to vector<64x8xf32>
    %25 = vector.broadcast %23 : vector<1x8xf32> to vector<64x8xf32>
    %26 = arith.mulf %24, %25 : vector<64x8xf32>
    %27 = arith.addf %21, %26 : vector<64x8xf32>
    %cst = arith.constant 0.000000e+00 : f32
    %28 = vector.broadcast %cst : f32 to vector<64x8xf32>
    %29 = arith.maximumf %27, %28 : vector<64x8xf32>
    %c0_5 = arith.constant 0 : index
    %c0_6 = arith.constant 0 : index
    %30 = vector.load %arg3[%c0_5, %c0_6] : memref<64x64xf32, #tpu.memory_space<vmem>>, vector<64x64xf32>
    %cst_7 = arith.constant dense<0.000000e+00> : vector<64x8xf32>
    %31 = tpu.matmul %30, %29, %cst_7 {dimension_numbers = #tpu.dot_dimension_numbers<[1], [0], [0], [1], [0, 0, 1, 1], [], []>} : vector<64x64xf32>, vector<64x8xf32>, vector<64x8xf32> -> vector<64x8xf32>
    %c0_8 = arith.constant 0 : index
    %c0_9 = arith.constant 0 : index
    %32 = vector.load %arg4[%c0_8, %c0_9] : memref<64x1xf32, #tpu.memory_space<vmem>>, vector<64x1xf32>
    %33 = vector.broadcast %32 : vector<64x1xf32> to vector<64x8xf32>
    %34 = arith.addf %31, %33 : vector<64x8xf32>
    %cst_10 = arith.constant 0.000000e+00 : f32
    %35 = vector.broadcast %cst_10 : f32 to vector<64x8xf32>
    %36 = arith.maximumf %34, %35 : vector<64x8xf32>
    %c0_11 = arith.constant 0 : index
    %c0_12 = arith.constant 0 : index
    %37 = vector.load %arg5[%c0_11, %c0_12] : memref<2x64xf32, #tpu.memory_space<vmem>>, vector<2x64xf32>
    %cst_13 = arith.constant dense<0.000000e+00> : vector<2x8xf32>
    %38 = tpu.matmul %37, %36, %cst_13 {dimension_numbers = #tpu.dot_dimension_numbers<[1], [0], [0], [1], [0, 0, 1, 1], [], []>} : vector<2x64xf32>, vector<64x8xf32>, vector<2x8xf32> -> vector<2x8xf32>
    %c0_14 = arith.constant 0 : index
    %c0_15 = arith.constant 0 : index
    %39 = vector.load %arg6[%c0_14, %c0_15] : memref<2x1xf32, #tpu.memory_space<vmem>>, vector<2x1xf32>
    %40 = vector.broadcast %39 : vector<2x1xf32> to vector<2x8xf32>
    %41 = arith.addf %38, %40 : vector<2x8xf32>
    %c0_16 = arith.constant 0 : index
    %c0_17 = arith.constant 0 : index
    %42 = vector.load %arg7[%c0_16, %c0_17] : memref<2x8xf32, #tpu.memory_space<vmem>>, vector<2x8xf32>
    tpu.vector_store %arg7[%c0_16, %c0_17], %41 {strides = array<i32>} : memref<2x8xf32, #tpu.memory_space<vmem>>, vector<2x8xf32>,
    return
  }
}

</mosaic_0001>

<llo_original>
// kernel: tpu_custom_call.1
$region0: #{tpu_custom_call.1}
  #allocation0 [shape = 'u32[]', space=smem, size = 0x4, offset = 0x4, fixed_abs, tag = 'smem constant byte address 0x4 - core index']
  #allocation1 [shape = 'u32[144,128]{1,0:T(1,128)}', space=vmem, size = 0x12000, scoped, tag = 'internal scratch']
  %s0 = inlined_call_operand.vmem [shape: f32[4,8], index: 0, kind: input, shape index: {}]
  %s1 = inlined_call_operand.vmem [shape: f32[64,4], index: 1, kind: input, shape index: {}]
  %s2 = inlined_call_operand.vmem [shape: f32[64,1], index: 2, kind: input, shape index: {}]
  %s3 = inlined_call_operand.vmem [shape: f32[64,64], index: 3, kind: input, shape index: {}]
  %s4 = inlined_call_operand.vmem [shape: f32[64,1], index: 4, kind: input, shape index: {}]
  %s5 = inlined_call_operand.vmem [shape: f32[2,64], index: 5, kind: input, shape index: {}]
  %s6 = inlined_call_operand.vmem [shape: f32[2,1], index: 6, kind: input, shape index: {}]
  %s7 = inlined_call_operand.hbm [shape: f32[2,8], index: 7, kind: output, shape index: {}]
  %s8 = sld [smem:[#allocation0]]
  $region38: #{tpu_custom_call.1} parent=0
    _
  %s10 = ssub.s32 1, %s8
  %s11 = scalar_select 0, %s10, %s8
  $region1: #{tpu_custom_call.1} parent=0
    #allocation2 [shape = 'u8[1024]{0}', space=vmem, size = 0x400, scoped, tag = 'output window, operand 0, single buffered']
    #allocation3 [shape = 's32[1]{0}', space=sflag, size = 0x4, scoped, tag = 'scoped memory for tpu_custom_call.1']
    %12 = vsyncpa [#allocation3], 0
    // Predicated region
    $region2: #{tpu_custom_call.1} parent=1 // pred_check
      _
    $region3: #{tpu_custom_call.1} parent=1 // pred_check_branch
      %14 = sbr.rel (0) target = $region5
    $region4: #{tpu_custom_call.1} parent=1 // pred_region
      _
    $region5: #{tpu_custom_call.1} parent=1 // pred_fallthru
      _
    // Predicated region
    $region6: #{tpu_custom_call.1} parent=1 // pred_check
      _
    $region7: #{tpu_custom_call.1} parent=1 // pred_check_branch
      %16 = sbr.rel (0) target = $region9
    $region8: #{tpu_custom_call.1} parent=1 // pred_region
      _
    $region9: #{tpu_custom_call.1} parent=1 // pred_fallthru
      _
    // Predicated region
    $region10: #{tpu_custom_call.1} parent=1 // pred_check
      _
    $region11: #{tpu_custom_call.1} parent=1 // pred_check_branch
      %18 = sbr.rel (0) target = $region13
    $region12: #{tpu_custom_call.1} parent=1 // pred_region
      _
    $region13: #{tpu_custom_call.1} parent=1 // pred_fallthru
      _
    // Predicated region
    $region14: #{tpu_custom_call.1} parent=1 // pred_check
      _
    $region15: #{tpu_custom_call.1} parent=1 // pred_check_branch
      %20 = sbr.rel (0) target = $region17
    $region16: #{tpu_custom_call.1} parent=1 // pred_region
      _
    $region17: #{tpu_custom_call.1} parent=1 // pred_fallthru
      _
    // Predicated region
    $region18: #{tpu_custom_call.1} parent=1 // pred_check
      _
    $region19: #{tpu_custom_call.1} parent=1 // pred_check_branch
      %22 = sbr.rel (0) target = $region21
    $region20: #{tpu_custom_call.1} parent=1 // pred_region
      _
    $region21: #{tpu_custom_call.1} parent=1 // pred_fallthru
      _
    // Predicated region
    $region22: #{tpu_custom_call.1} parent=1 // pred_check
      _
    $region23: #{tpu_custom_call.1} parent=1 // pred_check_branch
      %24 = sbr.rel (0) target = $region25
    $region24: #{tpu_custom_call.1} parent=1 // pred_region
      _
    $region25: #{tpu_custom_call.1} parent=1 // pred_fallthru
      _
    // Predicated region
    $region26: #{tpu_custom_call.1} parent=1 // pred_check
      _
    $region27: #{tpu_custom_call.1} parent=1 // pred_check_branch
      %26 = sbr.rel (0) target = $region29
    $region28: #{tpu_custom_call.1} parent=1 // pred_region
      _
    $region29: #{tpu_custom_call.1} parent=1 // pred_fallthru
      _
    %v27 = vld [vmem:[%s0] sm:$0xf]
    %v28 = vld [vmem:[%s1] sm:$0xff]
    %v29 = vld [vmem:[%s1 + $0x8] sm:$0xff]
    %v30 = vld [vmem:[%s1 + $0x10] sm:$0xff]
    %v31 = vld [vmem:[%s1 + $0x18] sm:$0xff]
    %v32 = vld [vmem:[%s1 + $0x20] sm:$0xff]
    %v33 = vld [vmem:[%s1 + $0x28] sm:$0xff]
    %v34 = vld [vmem:[%s1 + $0x30] sm:$0xff]
    %v35 = vld [vmem:[%s1 + $0x38] sm:$0xff]
    %v36 = vld [vmem:[%s2] sm:$0xff]
    %v37 = vld [vmem:[%s2 + $0x8] sm:$0xff]
    %v38 = vld [vmem:[%s2 + $0x10] sm:$0xff]
    %v39 = vld [vmem:[%s2 + $0x18] sm:$0xff]
    %v40 = vld [vmem:[%s2 + $0x20] sm:$0xff]
    %v41 = vld [vmem:[%s2 + $0x28] sm:$0xff]
    %v42 = vld [vmem:[%s2 + $0x30] sm:$0xff]
    %v43 = vld [vmem:[%s2 + $0x38] sm:$0xff]
    %45 = vset.pattern.permute.xlu0 0
    %46 = vperm.xlu0 %45, %v28
    %v47 = vpop.permute.xlu0 %46
    %50 = vset.pattern.permute.xlu0 0
    %51 = vperm.xlu0 %50, %v29
    %v52 = vpop.permute.xlu0 %51
    %55 = vset.pattern.permute.xlu0 0
    %56 = vperm.xlu0 %55, %v30
    %v57 = vpop.permute.xlu0 %56
    %60 = vset.pattern.permute.xlu0 0
    %61 = vperm.xlu0 %60, %v31
    %v62 = vpop.permute.xlu0 %61
    %65 = vset.pattern.permute.xlu0 0
    %66 = vperm.xlu0 %65, %v32
    %v67 = vpop.permute.xlu0 %66
    %70 = vset.pattern.permute.xlu0 0
    %71 = vperm.xlu0 %70, %v33
    %v72 = vpop.permute.xlu0 %71
    %75 = vset.pattern.permute.xlu0 0
    %76 = vperm.xlu0 %75, %v34
    %v77 = vpop.permute.xlu0 %76
    %80 = vset.pattern.permute.xlu0 0
    %81 = vperm.xlu0 %80, %v35
    %v82 = vpop.permute.xlu0 %81
    %v84 = vlaneseq
    %v85 = vshrl.u32 %v84, 7
    %v86 = vsub.s32 0, %v85
    %v87 = vrot.slane %v27, %v86
    %v88 = vmul.f32 %v47, %v87
    %v89 = vmul.f32 %v52, %v87
    %v90 = vmul.f32 %v57, %v87
    %v91 = vmul.f32 %v62, %v87
    %v92 = vmul.f32 %v67, %v87
    %v93 = vmul.f32 %v72, %v87
    %v94 = vmul.f32 %v77, %v87
    %v95 = vmul.f32 %v82, %v87
    %97 = vset.pattern.permute.xlu0 0
    %98 = vperm.xlu0 %97, %v36
    %v99 = vpop.permute.xlu0 %98
    %102 = vset.pattern.permute.xlu0 0
    %103 = vperm.xlu0 %102, %v37
    %v104 = vpop.permute.xlu0 %103
    %107 = vset.pattern.permute.xlu0 0
    %108 = vperm.xlu0 %107, %v38
    %v109 = vpop.permute.xlu0 %108
    %112 = vset.pattern.permute.xlu0 0
    %113 = vperm.xlu0 %112, %v39
    %v114 = vpop.permute.xlu0 %113
    %117 = vset.pattern.permute.xlu0 0
    %118 = vperm.xlu0 %117, %v40
    %v119 = vpop.permute.xlu0 %118
    %122 = vset.pattern.permute.xlu0 0
    %123 = vperm.xlu0 %122, %v41
    %v124 = vpop.permute.xlu0 %123
    %127 = vset.pattern.permute.xlu0 0
    %128 = vperm.xlu0 %127, %v42
    %v129 = vpop.permute.xlu0 %128
    %132 = vset.pattern.permute.xlu0 0
    %133 = vperm.xlu0 %132, %v43
    %v134 = vpop.permute.xlu0 %133
    %v136 = vadd.f32 %v99, %v88
    %v137 = vadd.f32 %v104, %v89
    %v138 = vadd.f32 %v109, %v90
    %v139 = vadd.f32 %v114, %v91
    %v140 = vadd.f32 %v119, %v92
    %v141 = vadd.f32 %v124, %v93
    %v142 = vadd.f32 %v129, %v94
    %v143 = vadd.f32 %v134, %v95
    %144 = vset.pattern.permute.xlu0 1
    %145 = vperm.xlu0 %144, %v28
    %v146 = vpop.permute.xlu0 %145
    %148 = vset.pattern.permute.xlu0 1
    %149 = vperm.xlu0 %148, %v29
    %v150 = vpop.permute.xlu0 %149
    %152 = vset.pattern.permute.xlu0 1
    %153 = vperm.xlu0 %152, %v30
    %v154 = vpop.permute.xlu0 %153
    %156 = vset.pattern.permute.xlu0 1
    %157 = vperm.xlu0 %156, %v31
    %v158 = vpop.permute.xlu0 %157
    %160 = vset.pattern.permute.xlu0 1
    %161 = vperm.xlu0 %160, %v32
    %v162 = vpop.permute.xlu0 %161
    %164 = vset.pattern.permute.xlu0 1
    %165 = vperm.xlu0 %164, %v33
    %v166 = vpop.permute.xlu0 %165
    %168 = vset.pattern.permute.xlu0 1
    %169 = vperm.xlu0 %168, %v34
    %v170 = vpop.permute.xlu0 %169
    %172 = vset.pattern.permute.xlu0 1
    %173 = vperm.xlu0 %172, %v35
    %v174 = vpop.permute.xlu0 %173
    %v176 = vlaneseq
    %v177 = vshrl.u32 %v176, 7
    %v178 = vsub.s32 1, %v177
    %v179 = vrot.slane %v27, %v178
    %v180 = vmul.f32 %v146, %v179
    %v181 = vmul.f32 %v150, %v179
    %v182 = vmul.f32 %v154, %v179
    %v183 = vmul.f32 %v158, %v179
    %v184 = vmul.f32 %v162, %v179
    %v185 = vmul.f32 %v166, %v179
    %v186 = vmul.f32 %v170, %v179
    %v187 = vmul.f32 %v174, %v179
    %v188 = vadd.f32 %v136, %v180
    %v189 = vadd.f32 %v137, %v181
    %v190 = vadd.f32 %v138, %v182
    %v191 = vadd.f32 %v139, %v183
    %v192 = vadd.f32 %v140, %v184
    %v193 = vadd.f32 %v141, %v185
    %v194 = vadd.f32 %v142, %v186
    %v195 = vadd.f32 %v143, %v187
    %196 = vset.pattern.permute.xlu0 2
    %197 = vperm.xlu0 %196, %v28
    %v198 = vpop.permute.xlu0 %197
    %200 = vset.pattern.permute.xlu0 2
    %201 = vperm.xlu0 %200, %v29
    %v202 = vpop.permute.xlu0 %201
    %204 = vset.pattern.permute.xlu0 2
    %205 = vperm.xlu0 %204, %v30
    %v206 = vpop.permute.xlu0 %205
    %208 = vset.pattern.permute.xlu0 2
    %209 = vperm.xlu0 %208, %v31
    %v210 = vpop.permute.xlu0 %209
    %212 = vset.pattern.permute.xlu0 2
    %213 = vperm.xlu0 %212, %v32
    %v214 = vpop.permute.xlu0 %213
    %216 = vset.pattern.permute.xlu0 2
    %217 = vperm.xlu0 %216, %v33
    %v218 = vpop.permute.xlu0 %217
    %220 = vset.pattern.permute.xlu0 2
    %221 = vperm.xlu0 %220, %v34
    %v222 = vpop.permute.xlu0 %221
    %224 = vset.pattern.permute.xlu0 2
    %225 = vperm.xlu0 %224, %v35
    %v226 = vpop.permute.xlu0 %225
    %v228 = vlaneseq
    %v229 = vshrl.u32 %v228, 7
    %v230 = vsub.s32 2, %v229
    %v231 = vrot.slane %v27, %v230
    %v232 = vmul.f32 %v198, %v231
    %v233 = vmul.f32 %v202, %v231
    %v234 = vmul.f32 %v206, %v231
    %v235 = vmul.f32 %v210, %v231
    %v236 = vmul.f32 %v214, %v231
    %v237 = vmul.f32 %v218, %v231
    %v238 = vmul.f32 %v222, %v231
    %v239 = vmul.f32 %v226, %v231
    %v240 = vadd.f32 %v188, %v232
    %v241 = vadd.f32 %v189, %v233
    %v242 = vadd.f32 %v190, %v234
    %v243 = vadd.f32 %v191, %v235
    %v244 = vadd.f32 %v192, %v236
    %v245 = vadd.f32 %v193, %v237
    %v246 = vadd.f32 %v194, %v238
    %v247 = vadd.f32 %v195, %v239
    %248 = vset.pattern.permute.xlu0 3
    %249 = vperm.xlu0 %248, %v28
    %v250 = vpop.permute.xlu0 %249
    %252 = vset.pattern.permute.xlu0 3
    %253 = vperm.xlu0 %252, %v29
    %v254 = vpop.permute.xlu0 %253
    %256 = vset.pattern.permute.xlu0 3
    %257 = vperm.xlu0 %256, %v30
    %v258 = vpop.permute.xlu0 %257
    %260 = vset.pattern.permute.xlu0 3
    %261 = vperm.xlu0 %260, %v31
    %v262 = vpop.permute.xlu0 %261
    %264 = vset.pattern.permute.xlu0 3
    %265 = vperm.xlu0 %264, %v32
    %v266 = vpop.permute.xlu0 %265
    %268 = vset.pattern.permute.xlu0 3
    %269 = vperm.xlu0 %268, %v33
    %v270 = vpop.permute.xlu0 %269
    %272 = vset.pattern.permute.xlu0 3
    %273 = vperm.xlu0 %272, %v34
    %v274 = vpop.permute.xlu0 %273
    %276 = vset.pattern.permute.xlu0 3
    %277 = vperm.xlu0 %276, %v35
    %v278 = vpop.permute.xlu0 %277
    %v280 = vlaneseq
    %v281 = vshrl.u32 %v280, 7
    %v282 = vsub.s32 3, %v281
    %v283 = vrot.slane %v27, %v282
    %v284 = vmul.f32 %v250, %v283
    %v285 = vmul.f32 %v254, %v283
    %v286 = vmul.f32 %v258, %v283
    %v287 = vmul.f32 %v262, %v283
    %v288 = vmul.f32 %v266, %v283
    %v289 = vmul.f32 %v270, %v283
    %v290 = vmul.f32 %v274, %v283
    %v291 = vmul.f32 %v278, %v283
    %v292 = vadd.f32 %v240, %v284
    %v293 = vadd.f32 %v241, %v285
    %v294 = vadd.f32 %v242, %v286
    %v295 = vadd.f32 %v243, %v287
    %v296 = vadd.f32 %v244, %v288
    %v297 = vadd.f32 %v245, %v289
    %v298 = vadd.f32 %v246, %v290
    %v299 = vadd.f32 %v247, %v291
    %v300 = vmax.f32 %v292, 0.0
    %v301 = vmax.f32 %v293, 0.0
    %v302 = vmax.f32 %v294, 0.0
    %v303 = vmax.f32 %v295, 0.0
    %v304 = vmax.f32 %v296, 0.0
    %v305 = vmax.f32 %v297, 0.0
    %v306 = vmax.f32 %v298, 0.0
    %v307 = vmax.f32 %v299, 0.0
    %v308 = vld [vmem:[%s3] sm:$0xff]
    %v309 = vld [vmem:[%s3 + $0x8] sm:$0xff]
    %v310 = vld [vmem:[%s3 + $0x10] sm:$0xff]
    %v311 = vld [vmem:[%s3 + $0x18] sm:$0xff]
    %v312 = vld [vmem:[%s3 + $0x20] sm:$0xff]
    %v313 = vld [vmem:[%s3 + $0x28] sm:$0xff]
    %v314 = vld [vmem:[%s3 + $0x30] sm:$0xff]
    %v315 = vld [vmem:[%s3 + $0x38] sm:$0xff]
    %v316 = vld [vmem:[%s4] sm:$0xff]
    %v317 = vld [vmem:[%s4 + $0x8] sm:$0xff]
    %v318 = vld [vmem:[%s4 + $0x10] sm:$0xff]
    %v319 = vld [vmem:[%s4 + $0x18] sm:$0xff]
    %v320 = vld [vmem:[%s4 + $0x20] sm:$0xff]
    %v321 = vld [vmem:[%s4 + $0x28] sm:$0xff]
    %v322 = vld [vmem:[%s4 + $0x30] sm:$0xff]
    %v323 = vld [vmem:[%s4 + $0x38] sm:$0xff]
    %325 = vset.pattern.permute.xlu0 0
    %326 = vperm.xlu0 %325, %v316
    %v327 = vpop.permute.xlu0 %326
    %330 = vset.pattern.permute.xlu0 0
    %331 = vperm.xlu0 %330, %v317
    %v332 = vpop.permute.xlu0 %331
    %335 = vset.pattern.permute.xlu0 0
    %336 = vperm.xlu0 %335, %v318
    %v337 = vpop.permute.xlu0 %336
    %340 = vset.pattern.permute.xlu0 0
    %341 = vperm.xlu0 %340, %v319
    %v342 = vpop.permute.xlu0 %341
    %345 = vset.pattern.permute.xlu0 0
    %346 = vperm.xlu0 %345, %v320
    %v347 = vpop.permute.xlu0 %346
    %350 = vset.pattern.permute.xlu0 0
    %351 = vperm.xlu0 %350, %v321
    %v352 = vpop.permute.xlu0 %351
    %355 = vset.pattern.permute.xlu0 0
    %356 = vperm.xlu0 %355, %v322
    %v357 = vpop.permute.xlu0 %356
    %360 = vset.pattern.permute.xlu0 0
    %361 = vperm.xlu0 %360, %v323
    %v362 = vpop.permute.xlu0 %361
    %vm364 = vcmask 523264
    %v366 = vsel %vm364, %v308, 0
    %v369 = vsel %vm364, %v309, 0
    %v372 = vsel %vm364, %v310, 0
    %v375 = vsel %vm364, %v311, 0
    %v378 = vsel %vm364, %v312, 0
    %v381 = vsel %vm364, %v313, 0
    %v384 = vsel %vm364, %v314, 0
    %v387 = vsel %vm364, %v315, 0
    %389 = vmatprep.subr.mxu0 0.0
    %390 = vmatpush1.msra.mxu0 %v300
    %391 = vmatprep.subr.mxu0 0.0
    %392 = vmatpush1.msra.mxu0 %v301
    %393 = vmatprep.subr.mxu0 0.0
    %394 = vmatpush1.msra.mxu0 %v302
    %395 = vmatprep.subr.mxu0 0.0
    %396 = vmatpush1.msra.mxu0 %v303
    %397 = vmatprep.subr.mxu0 0.0
    %398 = vmatpush1.msra.mxu0 %v304
    %399 = vmatprep.subr.mxu0 0.0
    %400 = vmatpush1.msra.mxu0 %v305
    %401 = vmatprep.subr.mxu0 0.0
    %402 = vmatpush1.msra.mxu0 %v306
    %403 = vmatprep.subr.mxu0 0.0
    %404 = vmatpush1.msra.mxu0 %v307
    %405 = vmatprep.subr.mxu0 0.0
    %406 = vmatpush1.msra.mxu0 0.0
    %407 = vmatprep.subr.mxu0 0.0
    %408 = vmatpush1.msra.mxu0 0.0
    %409 = vmatprep.subr.mxu0 0.0
    %410 = vmatpush1.msra.mxu0 0.0
    %411 = vmatprep.subr.mxu0 0.0
    %412 = vmatpush1.msra.mxu0 0.0
    %413 = vmatprep.subr.mxu0 0.0
    %414 = vmatpush1.msra.mxu0 0.0
    %415 = vmatprep.subr.mxu0 0.0
    %416 = vmatpush1.msra.mxu0 0.0
    %417 = vmatprep.subr.mxu0 0.0
    %418 = vmatpush1.msra.mxu0 0.0
    %419 = vmatprep.subr.mxu0 0.0
    %420 = vmatpush1.msra.mxu0 0.0
    %421 = vmatprep.subr.mxu0 0.0
    %422 = vmatpush1.msra.mxu0 0.0
    %423 = vmatprep.subr.mxu0 0.0
    %424 = vmatpush1.msra.mxu0 0.0
    %425 = vmatprep.subr.mxu0 0.0
    %426 = vmatpush1.msra.mxu0 0.0
    %427 = vmatprep.subr.mxu0 0.0
    %428 = vmatpush1.msra.mxu0 0.0
    %429 = vmatprep.subr.mxu0 0.0
    %430 = vmatpush1.msra.mxu0 0.0
    %431 = vmatprep.subr.mxu0 0.0
    %432 = vmatpush1.msra.mxu0 0.0
    %433 = vmatprep.subr.mxu0 0.0
    %434 = vmatpush1.msra.mxu0 0.0
    %435 = vmatprep.subr.mxu0 0.0
    %436 = vmatpush1.msra.mxu0 0.0
    %437 = vmatprep.subr.mxu0 0.0
    %438 = vmatpush1.msra.mxu0 0.0
    %439 = vmatprep.subr.mxu0 0.0
    %440 = vmatpush1.msra.mxu0 0.0
    %441 = vmatprep.subr.mxu0 0.0
    %442 = vmatpush1.msra.mxu0 0.0
    %443 = vmatprep.subr.mxu0 0.0
    %444 = vmatpush1.msra.mxu0 0.0
    %445 = vmatprep.subr.mxu0 0.0
    %446 = vmatpush1.msra.mxu0 0.0
    %447 = vmatprep.subr.mxu0 0.0
    %448 = vmatpush1.msra.mxu0 0.0
    %449 = vmatprep.subr.mxu0 0.0
    %450 = vmatpush1.msra.mxu0 0.0
    %451 = vmatprep.subr.mxu0 0.0
    %452 = vmatpush1.msra.mxu0 0.0
    %453 = vmatprep.mubr.f32.mxu0 0.0
    %454 = vmatmul.mubr.f32.gmra.mrb[0].mxu0 %v366
    %v455 = vpop.f32.mrb[0].mxu0
    %v456 = vadd.f32 %v327, %v455
    %v457 = vpop.f32.mrb[0].mxu0
    %458 = vmatprep.mubr.f32.mxu0 0.0
    %459 = vmatmul.mubr.f32.gmra.mrb[0].mxu0 %v369
    %v460 = vpop.f32.mrb[0].mxu0
    %v461 = vadd.f32 %v332, %v460
    %v462 = vpop.f32.mrb[0].mxu0
    %463 = vmatprep.mubr.f32.mxu0 0.0
    %464 = vmatmul.mubr.f32.gmra.mrb[0].mxu0 %v372
    %v465 = vpop.f32.mrb[0].mxu0
    %v466 = vadd.f32 %v337, %v465
    %v467 = vpop.f32.mrb[0].mxu0
    %468 = vmatprep.mubr.f32.mxu0 0.0
    %469 = vmatmul.mubr.f32.gmra.mrb[0].mxu0 %v375
    %v470 = vpop.f32.mrb[0].mxu0
    %v471 = vadd.f32 %v342, %v470
    %v472 = vpop.f32.mrb[0].mxu0
    %473 = vmatprep.mubr.f32.mxu0 0.0
    %474 = vmatmul.mubr.f32.gmra.mrb[0].mxu0 %v378
    %v475 = vpop.f32.mrb[0].mxu0
    %v476 = vadd.f32 %v347, %v475
    %v477 = vpop.f32.mrb[0].mxu0
    %478 = vmatprep.mubr.f32.mxu0 0.0
    %479 = vmatmul.mubr.f32.gmra.mrb[0].mxu0 %v381
    %v480 = vpop.f32.mrb[0].mxu0
    %v481 = vadd.f32 %v352, %v480
    %v482 = vpop.f32.mrb[0].mxu0
    %483 = vmatprep.mubr.f32.mxu0 0.0
    %484 = vmatmul.mubr.f32.gmra.mrb[0].mxu0 %v384
    %v485 = vpop.f32.mrb[0].mxu0
    %v486 = vadd.f32 %v357, %v485
    %v487 = vpop.f32.mrb[0].mxu0
    %488 = vmatprep.mubr.f32.mxu0 0.0
    %489 = vmatmul.mubr.f32.gmra.mrb[0].mxu0 %v387
    %v490 = vpop.f32.mrb[0].mxu0
    %v491 = vadd.f32 %v362, %v490
    %v492 = vpop.f32.mrb[0].mxu0
    %493 = vdwg.mxu0
    %v494 = vmax.f32 %v456, 0.0
    %v495 = vmax.f32 %v461, 0.0
    %v496 = vmax.f32 %v466, 0.0
    %v497 = vmax.f32 %v471, 0.0
    %v498 = vmax.f32 %v476, 0.0
    %v499 = vmax.f32 %v481, 0.0
    %v500 = vmax.f32 %v486, 0.0
    %v501 = vmax.f32 %v491, 0.0
    %v502 = vld [vmem:[%s5] sm:$0x3]
    %v503 = vld [vmem:[%s6] sm:$0x3]
    %505 = vset.pattern.permute.xlu0 0
    %506 = vperm.xlu0 %505, %v503
    %v507 = vpop.permute.xlu0 %506
    %v510 = vsel %vm364, %v502, 0
    %512 = vmatprep.subr.mxu0 0.0
    %513 = vmatpush1.msra.mxu0 %v494
    %514 = vmatprep.subr.mxu0 0.0
    %515 = vmatpush1.msra.mxu0 %v495
    %516 = vmatprep.subr.mxu0 0.0
    %517 = vmatpush1.msra.mxu0 %v496
    %518 = vmatprep.subr.mxu0 0.0
    %519 = vmatpush1.msra.mxu0 %v497
    %520 = vmatprep.subr.mxu0 0.0
    %521 = vmatpush1.msra.mxu0 %v498
    %522 = vmatprep.subr.mxu0 0.0
    %523 = vmatpush1.msra.mxu0 %v499
    %524 = vmatprep.subr.mxu0 0.0
    %525 = vmatpush1.msra.mxu0 %v500
    %526 = vmatprep.subr.mxu0 0.0
    %527 = vmatpush1.msra.mxu0 %v501
    %528 = vmatprep.subr.mxu0 0.0
    %529 = vmatpush1.msra.mxu0 0.0
    %530 = vmatprep.subr.mxu0 0.0
    %531 = vmatpush1.msra.mxu0 0.0
    %532 = vmatprep.subr.mxu0 0.0
    %533 = vmatpush1.msra.mxu0 0.0
    %534 = vmatprep.subr.mxu0 0.0
    %535 = vmatpush1.msra.mxu0 0.0
    %536 = vmatprep.subr.mxu0 0.0
    %537 = vmatpush1.msra.mxu0 0.0
    %538 = vmatprep.subr.mxu0 0.0
    %539 = vmatpush1.msra.mxu0 0.0
    %540 = vmatprep.subr.mxu0 0.0
    %541 = vmatpush1.msra.mxu0 0.0
    %542 = vmatprep.subr.mxu0 0.0
    %543 = vmatpush1.msra.mxu0 0.0
    %544 = vmatprep.subr.mxu0 0.0
    %545 = vmatpush1.msra.mxu0 0.0
    %546 = vmatprep.subr.mxu0 0.0
    %547 = vmatpush1.msra.mxu0 0.0
    %548 = vmatprep.subr.mxu0 0.0
    %549 = vmatpush1.msra.mxu0 0.0
    %550 = vmatprep.subr.mxu0 0.0
    %551 = vmatpush1.msra.mxu0 0.0
    %552 = vmatprep.subr.mxu0 0.0
    %553 = vmatpush1.msra.mxu0 0.0
    %554 = vmatprep.subr.mxu0 0.0
    %555 = vmatpush1.msra.mxu0 0.0
    %556 = vmatprep.subr.mxu0 0.0
    %557 = vmatpush1.msra.mxu0 0.0
    %558 = vmatprep.subr.mxu0 0.0
    %559 = vmatpush1.msra.mxu0 0.0
    %560 = vmatprep.subr.mxu0 0.0
    %561 = vmatpush1.msra.mxu0 0.0
    %562 = vmatprep.subr.mxu0 0.0
    %563 = vmatpush1.msra.mxu0 0.0
    %564 = vmatprep.subr.mxu0 0.0
    %565 = vmatpush1.msra.mxu0 0.0
    %566 = vmatprep.subr.mxu0 0.0
    %567 = vmatpush1.msra.mxu0 0.0
    %568 = vmatprep.subr.mxu0 0.0
    %569 = vmatpush1.msra.mxu0 0.0
    %570 = vmatprep.subr.mxu0 0.0
    %571 = vmatpush1.msra.mxu0 0.0
    %572 = vmatprep.subr.mxu0 0.0
    %573 = vmatpush1.msra.mxu0 0.0
    %574 = vmatprep.subr.mxu0 0.0
    %575 = vmatpush1.msra.mxu0 0.0
    %576 = vmatprep.mubr.f32.mxu0 0.0
    %577 = vmatmul.mubr.f32.gmra.mrb[0].mxu0 %v510
    %v578 = vpop.f32.mrb[0].mxu0
    %v579 = vadd.f32 %v507, %v578
    %v580 = vpop.f32.mrb[0].mxu0
    %581 = vdwg.mxu0
    %vm582 = vcmask 58368
    %583 = vst.msk [vmem:[#allocation2] sm:$0x3] %vm582, %v579
    // Predicated region
    $region30: #{tpu_custom_call.1} parent=1 // pred_check
      _
    $region31: #{tpu_custom_call.1} parent=1 // pred_check_branch
      %585 = sbr.rel (0) target = $region33
    $region32: #{tpu_custom_call.1} parent=1 // pred_region
      %s587 = ssub.s32 32, 32
      %588 = vsyncadd [#allocation3], %s587
      %s590 = sshll.u32 [#allocation2], 4
      %s591 = int_to_ptr.vmem [resolvable:$true] %s590
      %593 = dma.vmem_to_hbm [thread:$0]  %s591, 32, %s7, [#allocation3]
    $region33: #{tpu_custom_call.1} parent=1 // pred_fallthru
      _
    // Predicated region
    $region34: #{tpu_custom_call.1} parent=1 // pred_check
      _
    $region35: #{tpu_custom_call.1} parent=1 // pred_check_branch
      %595 = sbr.rel (0) target = $region37
    $region36: #{tpu_custom_call.1} parent=1 // pred_region
      %596 = dma.done [#allocation3], 32
    $region37: #{tpu_custom_call.1} parent=1 // pred_fallthru
      _
    %597 = vsyncpa [#allocation3], 1

</llo_original>
